<compile_context>
chip_gen: v6e
topology: v6e:2x2x1
jax: 0.10.0
libtpu: 0.0.40
codegen_flags: <defaults>
</compile_context>

<pallas_src>
import functools

import jax
import jax.numpy as jnp
from jax.experimental import pallas as pl
from jax.experimental.pallas import tpu as pltpu


def _mlp_similarity_kernel(t1_ref, t2_ref, w1_ref, w2_ref, b1_ref, b2_ref,
                           sw_ref, sb_ref, out_ref, p2_scratch, *, activation):
    """One grid step == one (batch, S1-tile) pair.

    t1_ref : (1, tS1, D1) VMEM   tensor_1 tile
    t2_ref : (1, S2,  D2) VMEM   tensor_2 for this batch element
    w1_ref : (D1, H)      VMEM   projection weight 1 (layout: x @ w1 + b1)
    w2_ref : (D2, H)      VMEM   projection weight 2
    b1_ref : (1, H)       VMEM   projection bias 1
    b2_ref : (1, H)       VMEM   projection bias 2
    sw_ref : (1, H)       VMEM   score weight
    sb_ref : (1,)         SMEM   score bias (zero when the module has bias=False)
    out_ref: (1, tS1, S2) VMEM
    p2_scratch: (S2, H) f32 VMEM scratch; computed once per batch element.
    """
    i = pl.program_id(1)

    # Project tensor_2 once per batch element and reuse across all S1 tiles.
    @pl.when(i == 0)
    def _():
        p2_scratch[...] = (
            jnp.dot(t2_ref[0], w2_ref[...], preferred_element_type=jnp.float32)
            + b2_ref[...]
        )

    # Project this tensor_1 tile: (tS1, D1) @ (D1, H) + (1, H) -> (tS1, H).
    p1 = (jnp.dot(t1_ref[0], w1_ref[...], preferred_element_type=jnp.float32)
          + b1_ref[...])

    # combined[r, j, h] = p1[r, h] + p2[j, h]  -> (tS1, S2, H)
    combined = p1[:, None, :] + p2_scratch[...][None, :, :]
    act = activation(combined) if activation is not None else combined

    # result[r, j] = sum_h act[r, j, h] * score_w[h]
    # (tanh on EUP dominates; VPU multiply + XLU lane-reduce ride in free slots.)
    sw = sw_ref[0]                              # (H,)
    res = jnp.sum(act * sw, axis=-1)            # (tS1, S2)
    res = res + sb_ref[0]                       # SMEM scalar score bias

    out_ref[0] = res.astype(out_ref.dtype)


def _pick_s1_tile(S1, S2, H, budget_bytes=2 << 20):
    """Largest divisor of S1 whose (tS1, S2, H) f32 intermediate fits the budget.

    Only halves while the result stays a multiple of 8 (sublane constraint);
    a block equal to the full dim is always legal, so tiny S1 passes through.
    """
    max_rows = max(1, budget_bytes // max(1, S2 * H * 4))
    ts1 = S1
    while ts1 > max_rows and ts1 % 16 == 0:
        ts1 //= 2
    return ts1


def mlp_similarity(tensor_1, tensor_2, w1, b1, w2, b2, score_weight,
                   score_bias=None, activation=jnp.tanh):
    """Pallas TPU implementation of MLPSimilarity.forward."""
    B, S1, D1 = tensor_1.shape
    B2, S2, D2 = tensor_2.shape
    assert B2 == B
    H = w1.shape[1]
    assert w1.shape == (D1, H) and w2.shape == (D2, H)
    assert b1.shape == (H,) and b2.shape == (H,)
    assert score_weight.shape == (H,)

    tS1 = _pick_s1_tile(S1, S2, H)
    assert S1 % tS1 == 0
    num_i = S1 // tS1

    # Lane-friendly 2-D parameter layouts; score bias always present (0 if None)
    # so its value is never baked into the compiled kernel.
    b1_2d = b1.reshape(1, H).astype(jnp.float32)
    b2_2d = b2.reshape(1, H).astype(jnp.float32)
    sw_2d = score_weight.reshape(1, H).astype(jnp.float32)
    sb = (jnp.zeros((1,), jnp.float32) if score_bias is None
          else jnp.asarray(score_bias, jnp.float32).reshape(1))

    # Explicit VMEM budget: double-buffered inputs/outputs + resident weights
    # + p2 scratch + the (tS1, S2, H) intermediates, with ~50% headroom,
    # clamped to stay inside v7x's 64 MiB physical VMEM.
    itm = tensor_1.dtype.itemsize
    per_step = (2 * tS1 * D1 * itm            # t1 tile (double buffered)
                + 2 * S2 * D2 * itm           # t2 block
                + 2 * (D1 + D2 + 3) * H * 4   # weights + bias/score rows
                + 2 * tS1 * S2 * itm          # output tile
                + S2 * H * 4                  # p2 scratch
                + 3 * tS1 * S2 * H * 4)       # combined / tanh / weighted
    vmem_limit = max(8 << 20, min(int(per_step * 1.5) + (2 << 20), 64 << 20))

    kernel = functools.partial(_mlp_similarity_kernel, activation=activation)

    return pl.pallas_call(
        kernel,
        out_shape=jax.ShapeDtypeStruct((B, S1, S2), tensor_1.dtype),
        grid_spec=pltpu.PrefetchScalarGridSpec(
            num_scalar_prefetch=0,
            grid=(B, num_i),
            in_specs=[
                pl.BlockSpec((1, tS1, D1), lambda b, i: (b, i, 0)),
                pl.BlockSpec((1, S2, D2), lambda b, i: (b, 0, 0)),
                pl.BlockSpec((D1, H), lambda b, i: (0, 0)),
                pl.BlockSpec((D2, H), lambda b, i: (0, 0)),
                pl.BlockSpec((1, H), lambda b, i: (0, 0)),
                pl.BlockSpec((1, H), lambda b, i: (0, 0)),
                pl.BlockSpec((1, H), lambda b, i: (0, 0)),
                pl.BlockSpec(memory_space=pltpu.MemorySpace.SMEM),
            ],
            out_specs=pl.BlockSpec((1, tS1, S2), lambda b, i: (b, i, 0)),
            scratch_shapes=[pltpu.VMEM((S2, H), jnp.float32)],
        ),
        compiler_params=pltpu.CompilerParams(
            dimension_semantics=("parallel", "arbitrary"),
            vmem_limit_bytes=vmem_limit),
    )(tensor_1, tensor_2, w1, w2, b1_2d, b2_2d, sw_2d, sb)


if __name__ == "__main__":
    # Small shapes: batch=2, seq1=8, seq2=8, tensor_1_dim=32, tensor_2_dim=32, hidden=32
    B, S1, S2, D1, D2, H = 2, 8, 8, 32, 32, 32

    key = jax.random.PRNGKey(0)
    k1, k2, k3, k4, k5, k6, k7 = jax.random.split(key, 7)

    tensor_1 = jax.random.normal(k1, (B, S1, D1), jnp.float32)
    tensor_2 = jax.random.normal(k2, (B, S2, D2), jnp.float32)

    # nn.Linear(D, H) parameters, stored as (D, H) so projection is x @ w + b.
    lim1 = 1.0 / (D1 ** 0.5)
    lim2 = 1.0 / (D2 ** 0.5)
    w1 = jax.random.uniform(k3, (D1, H), jnp.float32, -lim1, lim1)
    b1 = jax.random.uniform(k4, (H,), jnp.float32, -lim1, lim1)
    w2 = jax.random.uniform(k5, (D2, H), jnp.float32, -lim2, lim2)
    b2 = jax.random.uniform(k6, (H,), jnp.float32, -lim2, lim2)

    std = (6.0 / (H + 1)) ** 0.5
    score_weight = jax.random.uniform(k7, (H,), jnp.float32, -std, std)
    score_bias = jnp.asarray([0.25], jnp.float32)   # exercise the bias path

    # TODO(synk): arbitrary user-supplied Python `activation` callables are only
    # supported if they are JAX-traceable elementwise functions (default tanh is).
    out = mlp_similarity(tensor_1, tensor_2, w1, b1, w2, b2,
                         score_weight, score_bias=score_bias,
                         activation=jnp.tanh)
    out = jax.block_until_ready(out)

    # Pure-JAX reference (same math as the PyTorch forward).
    p1 = tensor_1 @ w1 + b1
    p2 = tensor_2 @ w2 + b2
    combined = p1[:, :, None, :] + p2[:, None, :, :]
    ref = jnp.tanh(combined) @ score_weight + score_bias[0]

    assert out.shape == (B, S1, S2)
    assert jnp.allclose(out, ref, atol=1e-4, rtol=1e-4), \
        float(jnp.max(jnp.abs(out - ref)))

    print("KERNEL_OK")
</pallas_src>

<mosaic_0001>
module attributes {stable_mosaic.version = 11 : i64} {
  func.func @_mlp_similarity_kernel(%arg0: i32, %arg1: i32, %arg2: memref<1x8x32xf32, #tpu.memory_space<vmem>>, %arg3: memref<1x8x32xf32, #tpu.memory_space<vmem>>, %arg4: memref<32x32xf32, #tpu.memory_space<vmem>>, %arg5: memref<32x32xf32, #tpu.memory_space<vmem>>, %arg6: memref<1x32xf32, #tpu.memory_space<vmem>>, %arg7: memref<1x32xf32, #tpu.memory_space<vmem>>, %arg8: memref<1x32xf32, #tpu.memory_space<vmem>>, %arg9: memref<1xf32, #tpu.memory_space<smem>>, %arg10: memref<1x8x8xf32, #tpu.memory_space<vmem>>, %arg11: memref<8x32xf32, #tpu.memory_space<vmem>>) attributes {dimension_semantics = [#tpu.dimension_semantics<parallel>, #tpu.dimension_semantics<arbitrary>], iteration_bounds = array<i64: 2, 1>, scalar_prefetch = 0 : i64, scratch_operands = 1 : i64, tpu.core_type = #tpu.core_type<tc>, window_params = [{transform_indices = @transform_0, window_bounds = array<i64: 1, 8, 32>}, {transform_indices = @transform_1, window_bounds = array<i64: 1, 8, 32>}, {pipeline_mode = #tpu.pipeline_mode<synchronous>, transform_indices = @transform_2, window_bounds = array<i64: 32, 32>}, {pipeline_mode = #tpu.pipeline_mode<synchronous>, transform_indices = @transform_3, window_bounds = array<i64: 32, 32>}, {pipeline_mode = #tpu.pipeline_mode<synchronous>, transform_indices = @transform_4, window_bounds = array<i64: 1, 32>}, {pipeline_mode = #tpu.pipeline_mode<synchronous>, transform_indices = @transform_5, window_bounds = array<i64: 1, 32>}, {pipeline_mode = #tpu.pipeline_mode<synchronous>, transform_indices = @transform_6, window_bounds = array<i64: 1, 32>}, {transform_indices = @transform_7, window_bounds = array<i64: 1>}, {transform_indices = @transform_8, window_bounds = array<i64: 1, 8, 8>}]} {
    %c0_i32 = arith.constant 0 : i32
    %0 = arith.cmpi eq, %arg1, %c0_i32 : i32
    %1 = arith.extui %0 : i1 to i32
    %c0_i32_0 = arith.constant 0 : i32
    %2 = arith.cmpi ne, %1, %c0_i32_0 : i32
    scf.if %2 {
      %c0_16 = arith.constant 0 : index
      %c0_17 = arith.constant 0 : index
      %c0_18 = arith.constant 0 : index
      %29 = vector.load %arg3[%c0_16, %c0_17, %c0_18] : memref<1x8x32xf32, #tpu.memory_space<vmem>>, vector<1x8x32xf32>
      %30 = vector.shape_cast %29 : vector<1x8x32xf32> to vector<8x32xf32>
      %c0_19 = arith.constant 0 : index
      %c0_20 = arith.constant 0 : index
      %31 = vector.load %arg5[%c0_19, %c0_20] : memref<32x32xf32, #tpu.memory_space<vmem>>, vector<32x32xf32>
      %cst_21 = arith.constant dense<0.000000e+00> : vector<8x32xf32>
      %32 = tpu.matmul %30, %31, %cst_21 {dimension_numbers = #tpu.dot_dimension_numbers<[1], [0], [0], [1], [0, 0, 1, 1], [], []>} : vector<8x32xf32>, vector<32x32xf32>, vector<8x32xf32> -> vector<8x32xf32>
      %c0_22 = arith.constant 0 : index
      %c0_23 = arith.constant 0 : index
      %33 = vector.load %arg7[%c0_22, %c0_23] : memref<1x32xf32, #tpu.memory_space<vmem>>, vector<1x32xf32>
      %34 = vector.broadcast %33 : vector<1x32xf32> to vector<8x32xf32>
      %35 = arith.addf %32, %34 : vector<8x32xf32>
      %c0_24 = arith.constant 0 : index
      %c0_25 = arith.constant 0 : index
      %36 = vector.load %arg11[%c0_24, %c0_25] : memref<8x32xf32, #tpu.memory_space<vmem>>, vector<8x32xf32>
      tpu.vector_store %arg11[%c0_24, %c0_25], %35 {strides = array<i32>} : memref<8x32xf32, #tpu.memory_space<vmem>>, vector<8x32xf32>,
    } else {
    }
    %c0 = arith.constant 0 : index
    %c0_1 = arith.constant 0 : index
    %c0_2 = arith.constant 0 : index
    %3 = vector.load %arg2[%c0, %c0_1, %c0_2] : memref<1x8x32xf32, #tpu.memory_space<vmem>>, vector<1x8x32xf32>
    %4 = vector.shape_cast %3 : vector<1x8x32xf32> to vector<8x32xf32>
    %c0_3 = arith.constant 0 : index
    %c0_4 = arith.constant 0 : index
    %5 = vector.load %arg4[%c0_3, %c0_4] : memref<32x32xf32, #tpu.memory_space<vmem>>, vector<32x32xf32>
    %cst = arith.constant dense<0.000000e+00> : vector<8x32xf32>
    %6 = tpu.matmul %4, %5, %cst {dimension_numbers = #tpu.dot_dimension_numbers<[1], [0], [0], [1], [0, 0, 1, 1], [], []>} : vector<8x32xf32>, vector<32x32xf32>, vector<8x32xf32> -> vector<8x32xf32>
    %c0_5 = arith.constant 0 : index
    %c0_6 = arith.constant 0 : index
    %7 = vector.load %arg6[%c0_5, %c0_6] : memref<1x32xf32, #tpu.memory_space<vmem>>, vector<1x32xf32>
    %8 = vector.broadcast %7 : vector<1x32xf32> to vector<8x32xf32>
    %9 = arith.addf %6, %8 : vector<8x32xf32>
    %10 = vector.shape_cast %9 : vector<8x32xf32> to vector<8x1x32xf32>
    %c0_7 = arith.constant 0 : index
    %c0_8 = arith.constant 0 : index
    %11 = vector.load %arg11[%c0_7, %c0_8] : memref<8x32xf32, #tpu.memory_space<vmem>>, vector<8x32xf32>
    %12 = vector.shape_cast %11 : vector<8x32xf32> to vector<1x8x32xf32>
    %13 = vector.broadcast %10 : vector<8x1x32xf32> to vector<8x8x32xf32>
    %14 = vector.broadcast %12 : vector<1x8x32xf32> to vector<8x8x32xf32>
    %15 = arith.addf %13, %14 : vector<8x8x32xf32>
    %16 = math.tanh %15 : vector<8x8x32xf32>
    %c0_9 = arith.constant 0 : index
    %c0_10 = arith.constant 0 : index
    %17 = vector.load %arg8[%c0_9, %c0_10] : memref<1x32xf32, #tpu.memory_space<vmem>>, vector<1x32xf32>
    %18 = vector.shape_cast %17 : vector<1x32xf32> to vector<32xf32>
    %19 = vector.shape_cast %18 : vector<32xf32> to vector<1x1x32xf32>
    %20 = vector.broadcast %19 : vector<1x1x32xf32> to vector<8x8x32xf32>
    %21 = arith.mulf %16, %20 : vector<8x8x32xf32>
    %cst_11 = arith.constant dense<0.000000e+00> : vector<8x8xf32>
    %22 = vector.multi_reduction <add>, %21, %cst_11 [2] : vector<8x8x32xf32> to vector<8x8xf32>
    %c0_12 = arith.constant 0 : index
    %23 = memref.load %arg9[%c0_12] : memref<1xf32, #tpu.memory_space<smem>>
    %24 = vector.broadcast %23 : f32 to vector<8x8xf32>
    %25 = arith.addf %22, %24 : vector<8x8xf32>
    %c0_13 = arith.constant 0 : index
    %c0_14 = arith.constant 0 : index
    %c0_15 = arith.constant 0 : index
    %26 = vector.load %arg10[%c0_13, %c0_14, %c0_15] : memref<1x8x8xf32, #tpu.memory_space<vmem>>, vector<1x8x8xf32>
    %27 = vector.shape_cast %26 : vector<1x8x8xf32> to vector<8x8xf32>
    %28 = vector.shape_cast %25 : vector<8x8xf32> to vector<1x8x8xf32>
    tpu.vector_store %arg10[%c0_13, %c0_14, %c0_15], %28 {strides = array<i32>} : memref<1x8x8xf32, #tpu.memory_space<vmem>>, vector<1x8x8xf32>,
    return
  }
  func.func @transform_0(%arg0: i32, %arg1: i32) -> (i32, i32, i32) {
    %c0_i32 = arith.constant 0 : i32
    %c0_i32_0 = arith.constant 0 : i32
    return %arg0, %arg1, %c0_i32 : i32, i32, i32
  }
  func.func @transform_1(%arg0: i32, %arg1: i32) -> (i32, i32, i32) {
    %c0_i32 = arith.constant 0 : i32
    %c0_i32_0 = arith.constant 0 : i32
    %c0_i32_1 = arith.constant 0 : i32
    return %arg0, %c0_i32, %c0_i32_0 : i32, i32, i32
  }
  func.func @transform_2(%arg0: i32, %arg1: i32) -> (i32, i32) {
    %c0_i32 = arith.constant 0 : i32
    %c0_i32_0 = arith.constant 0 : i32
    %c0_i32_1 = arith.constant 0 : i32
    return %c0_i32, %c0_i32_0 : i32, i32
  }
  func.func @transform_3(%arg0: i32, %arg1: i32) -> (i32, i32) {
    %c0_i32 = arith.constant 0 : i32
    %c0_i32_0 = arith.constant 0 : i32
    %c0_i32_1 = arith.constant 0 : i32
    return %c0_i32, %c0_i32_0 : i32, i32
  }
  func.func @transform_4(%arg0: i32, %arg1: i32) -> (i32, i32) {
    %c0_i32 = arith.constant 0 : i32
    %c0_i32_0 = arith.constant 0 : i32
    %c0_i32_1 = arith.constant 0 : i32
    return %c0_i32, %c0_i32_0 : i32, i32
  }
  func.func @transform_5(%arg0: i32, %arg1: i32) -> (i32, i32) {
    %c0_i32 = arith.constant 0 : i32
    %c0_i32_0 = arith.constant 0 : i32
    %c0_i32_1 = arith.constant 0 : i32
    return %c0_i32, %c0_i32_0 : i32, i32
  }
  func.func @transform_6(%arg0: i32, %arg1: i32) -> (i32, i32) {
    %c0_i32 = arith.constant 0 : i32
    %c0_i32_0 = arith.constant 0 : i32
    %c0_i32_1 = arith.constant 0 : i32
    return %c0_i32, %c0_i32_0 : i32, i32
  }
  func.func @transform_7(%arg0: i32, %arg1: i32) -> i32 {
    %c0_i32 = arith.constant 0 : i32
    %c0_i32_0 = arith.constant 0 : i32
    return %c0_i32 : i32
  }
  func.func @transform_8(%arg0: i32, %arg1: i32) -> (i32, i32, i32) {
    %c0_i32 = arith.constant 0 : i32
    %c0_i32_0 = arith.constant 0 : i32
    return %arg0, %arg1, %c0_i32 : i32, i32, i32
  }
}

</mosaic_0001>

<llo_original>
// kernel: tpu_custom_call.1
$region0: #{tpu_custom_call.1}
  #allocation0 [shape = 'u32[]', space=smem, size = 0x4, offset = 0x4, fixed_abs, tag = 'smem constant byte address 0x4 - core index']
  #allocation1 [shape = 'u32[144,128]{1,0:T(1,128)}', space=vmem, size = 0x12000, scoped, tag = 'internal scratch']
  #allocation2 [shape = 'f32[8,32]{1,0:T(8,128)}', space=vmem, size = 0x1000, scoped, tag = 'scratch operand']
  #allocation3 [shape = 'f32[1]{0:T(128)S(6)}', space=smem, size = 0x200, scoped, tag = 'scoped memory for tpu_custom_call.1']
  %s0 = inlined_call_operand.hbm [shape: f32[2,8,32], index: 0, kind: input, shape index: {}]
  %s1 = inlined_call_operand.hbm [shape: f32[2,8,32], index: 1, kind: input, shape index: {}]
  %s2 = inlined_call_operand.hbm [shape: f32[32,32], index: 2, kind: input, shape index: {}]
  %s3 = inlined_call_operand.hbm [shape: f32[32,32], index: 3, kind: input, shape index: {}]
  %s4 = inlined_call_operand.vmem [shape: f32[1,32], index: 4, kind: input, shape index: {}]
  %s5 = inlined_call_operand.vmem [shape: f32[1,32], index: 5, kind: input, shape index: {}]
  %s6 = inlined_call_operand.vmem [shape: f32[1,32], index: 6, kind: input, shape index: {}]
  %s7 = inlined_call_operand.<no memory space> [shape: f32[1], index: 7, kind: input, shape index: {}]
  %s8 = inlined_call_operand.hbm [shape: f32[2,8,8], index: 8, kind: output, shape index: {}]
  %s9 = sld [smem:[#allocation0]]
  $region85: #{tpu_custom_call.1} parent=0
    _
  %s11 = ssub.s32 1, %s9
  %s12 = scalar_select 0, %s11, %s9
  %13 = sst [smem:[#allocation3]] %s7
  $region1: #{tpu_custom_call.1} parent=0
    #allocation4 [shape = 'u8[8192]{0}', space=vmem, size = 0x2000, scoped, tag = 'input window, operand 0']
    #allocation5 [shape = 's32[2]{0}', space=sflag, size = 0x8, scoped, tag = 'scoped memory for tpu_custom_call.1']
    #allocation6 [shape = 's32[2]{0}', space=sflag, size = 0x8, scoped, tag = 'scoped memory for tpu_custom_call.1']
    #allocation7 [shape = 'u8[8192]{0}', space=vmem, size = 0x2000, scoped, tag = 'input window, operand 1']
    #allocation8 [shape = 's32[2]{0}', space=sflag, size = 0x8, scoped, tag = 'scoped memory for tpu_custom_call.1']
    #allocation9 [shape = 'u8[16384]{0}', space=vmem, size = 0x4000, scoped, tag = 'input window, operand 2, single buffered']
    #allocation10 [shape = 'u8[16384]{0}', space=vmem, size = 0x4000, scoped, tag = 'input window, operand 3, single buffered']
    #allocation11 [shape = 's32[1]{0}', space=sflag, size = 0x4, scoped, tag = 'scoped memory for tpu_custom_call.1']
    #allocation12 [shape = 'u8[8192]{0}', space=vmem, size = 0x2000, scoped, tag = 'output window, operand 0']
    %14 = vsyncpa [#allocation5], 0
    %s15 = scalar_lea.sflag [#allocation5], 1
    %16 = vsyncpa %s15, 0
    %17 = vsyncpa [#allocation8], 0
    %s18 = scalar_lea.sflag [#allocation8], 1
    %19 = vsyncpa %s18, 0
    %20 = vsyncpa [#allocation11], 0
    %21 = vsyncpa [#allocation6], 0
    %s22 = scalar_lea.sflag [#allocation6], 1
    %23 = vsyncpa %s22, 0
    loop: start=0, step=1, limit=4
    $region2: #{tpu_custom_call.1} parent=1 // loop_pre_header
      _
    $region3: #{tpu_custom_call.1} parent=1 // loop_header
      %s25 = sphi 0, %s29
      %p26 = scmp.ge.s32.totalorder %s25, 4
      %s32 = sphi 0, %s44
      %s33 = sphi 0, %s40
      %s34 = sphi 0, %s32
      %s35 = sphi 0, %s33
      %s36 = sphi 0, %s34
      %s37 = sphi 0, %s35
      %s49 = sphi 0, %s51
      %s52 = sphi 0, %s49
      %s53 = sphi 0, %s52
      %s69 = sphi 0, %s53
      %s75 = sphi 0, %s77
      %s78 = sphi 0, %s75
      %s79 = sphi 0, %s78
      %s95 = sphi 0, %s79
      %s99 = sphi 0, %s99
      %s101 = sphi 0, %s99
      %s102 = sphi 0, %s101
      %s116 = sphi 0, %s102
      %s120 = sphi 0, %s120
      %s122 = sphi 0, %s120
      %s123 = sphi 0, %s122
      %s137 = sphi 0, %s123
      %s141 = sphi 0, %s141
      %s143 = sphi 0, %s141
      %s144 = sphi 0, %s143
      %s158 = sphi 0, %s144
      %s162 = sphi 0, %s162
      %s164 = sphi 0, %s162
      %s165 = sphi 0, %s164
      %s179 = sphi 0, %s165
      %s183 = sphi 0, %s183
      %s185 = sphi 0, %s183
      %s186 = sphi 0, %s185
      %s200 = sphi 0, %s186
      %s204 = sphi 0, %s204
      %s206 = sphi 0, %s204
      %s207 = sphi 0, %s206
      %s221 = sphi 0, %s207
      %s229 = sphi 0, %s231
      %s232 = sphi 0, %s229
      %s233 = sphi 0, %s232
      %s249 = sphi 0, %s233
    $region4: #{tpu_custom_call.1} parent=1 // loop_header_branch
      %28 = sbr.rel (%p26) target = $region8
    $region5: #{tpu_custom_call.1} parent=1 // loop_body
      %s30 = ssub.s32 %s25, 1
      %s31 = ssub.s32 %s25, 2
      %s38 = sadd.s32 1, %s33
      %p39 = scmp.ge.s32.totalorder %s38, 1
      %s40 = scalar_select %p39, 0, %s38
      %s41 = sadd.s32 1, %s32
      %s42 = scalar_select %p39, %s41, %s32
      %p43 = scmp.ge.s32.totalorder %s42, 2
      %s44 = scalar_select %p43, 0, %s42
      %s45 = ssub.s32 %s32, %s44
      %s46 = ssub.s32 %s33, %s40
      %s47 = sor.u32 %s45, %s46
      %p48 = scmp.eq.s32.totalorder %s47, 0
      %s50 = sadd.s32 %s49, 1
      %s51 = scalar_select %p48, %s49, %s50
      %p54 = pneg %p48
      %p55 = scmp.eq.s32.totalorder %s25, 1
      %p56 = por %p54, %p55
      %p57 = scmp.ne.s32.totalorder %s49, %s52
      %p58 = scmp.eq.s32.totalorder %s25, 0
      %p59 = por %p57, %p58
      %p60 = scmp.ne.s32.totalorder %s49, %s52
      %p61 = scmp.eq.s32.totalorder %s30, 1
      %p62 = por %p60, %p61
      %p63 = scmp.ne.s32.totalorder %s52, %s53
      %p64 = scmp.eq.s32.totalorder %s30, 0
      %p65 = por %p63, %p64
      %p66 = scmp.ne.s32.totalorder %s52, %s53
      %p67 = scmp.eq.s32.totalorder %s31, 1
      %p68 = por %p66, %p67
      %p70 = scmp.ne.s32.totalorder %s53, %s69
      %p71 = scmp.eq.s32.totalorder %s31, 0
      %p72 = por %p70, %p71
      %s73 = ssub.s32 %s32, %s44
      %p74 = scmp.eq.s32.totalorder %s73, 0
      %s76 = sadd.s32 %s75, 1
      %s77 = scalar_select %p74, %s75, %s76
      %p80 = pneg %p74
      %p81 = scmp.eq.s32.totalorder %s25, 1
      %p82 = por %p80, %p81
      %p83 = scmp.ne.s32.totalorder %s75, %s78
      %p84 = scmp.eq.s32.totalorder %s25, 0
      %p85 = por %p83, %p84
      %p86 = scmp.ne.s32.totalorder %s75, %s78
      %p87 = scmp.eq.s32.totalorder %s30, 1
      %p88 = por %p86, %p87
      %p89 = scmp.ne.s32.totalorder %s78, %s79
      %p90 = scmp.eq.s32.totalorder %s30, 0
      %p91 = por %p89, %p90
      %p92 = scmp.ne.s32.totalorder %s78, %s79
      %p93 = scmp.eq.s32.totalorder %s31, 1
      %p94 = por %p92, %p93
      %p96 = scmp.ne.s32.totalorder %s79, %s95
      %p97 = scmp.eq.s32.totalorder %s31, 0
      %p98 = por %p96, %p97
      %s100 = sadd.s32 %s99, 1
      %p103 = scmp.eq.s32.totalorder %s25, 1
      %p104 = scmp.ne.s32.totalorder %s99, %s101
      %p105 = scmp.eq.s32.totalorder %s25, 0
      %p106 = por %p104, %p105
      %p107 = scmp.ne.s32.totalorder %s99, %s101
      %p108 = scmp.eq.s32.totalorder %s30, 1
      %p109 = por %p107, %p108
      %p110 = scmp.ne.s32.totalorder %s101, %s102
      %p111 = scmp.eq.s32.totalorder %s30, 0
      %p112 = por %p110, %p111
      %p113 = scmp.ne.s32.totalorder %s101, %s102
      %p114 = scmp.eq.s32.totalorder %s31, 1
      %p115 = por %p113, %p114
      %p117 = scmp.ne.s32.totalorder %s102, %s116
      %p118 = scmp.eq.s32.totalorder %s31, 0
      %p119 = por %p117, %p118
      %s121 = sadd.s32 %s120, 1
      %p124 = scmp.eq.s32.totalorder %s25, 1
      %p125 = scmp.ne.s32.totalorder %s120, %s122
      %p126 = scmp.eq.s32.totalorder %s25, 0
      %p127 = por %p125, %p126
      %p128 = scmp.ne.s32.totalorder %s120, %s122
      %p129 = scmp.eq.s32.totalorder %s30, 1
      %p130 = por %p128, %p129
      %p131 = scmp.ne.s32.totalorder %s122, %s123
      %p132 = scmp.eq.s32.totalorder %s30, 0
      %p133 = por %p131, %p132
      %p134 = scmp.ne.s32.totalorder %s122, %s123
      %p135 = scmp.eq.s32.totalorder %s31, 1
      %p136 = por %p134, %p135
      %p138 = scmp.ne.s32.totalorder %s123, %s137
      %p139 = scmp.eq.s32.totalorder %s31, 0
      %p140 = por %p138, %p139
      %s142 = sadd.s32 %s141, 1
      %p145 = scmp.eq.s32.totalorder %s25, 1
      %p146 = scmp.ne.s32.totalorder %s141, %s143
      %p147 = scmp.eq.s32.totalorder %s25, 0
      %p148 = por %p146, %p147
      %p149 = scmp.ne.s32.totalorder %s141, %s143
      %p150 = scmp.eq.s32.totalorder %s30, 1
      %p151 = por %p149, %p150
      %p152 = scmp.ne.s32.totalorder %s143, %s144
      %p153 = scmp.eq.s32.totalorder %s30, 0
      %p154 = por %p152, %p153
      %p155 = scmp.ne.s32.totalorder %s143, %s144
      %p156 = scmp.eq.s32.totalorder %s31, 1
      %p157 = por %p155, %p156
      %p159 = scmp.ne.s32.totalorder %s144, %s158
      %p160 = scmp.eq.s32.totalorder %s31, 0
      %p161 = por %p159, %p160
      %s163 = sadd.s32 %s162, 1
      %p166 = scmp.eq.s32.totalorder %s25, 1
      %p167 = scmp.ne.s32.totalorder %s162, %s164
      %p168 = scmp.eq.s32.totalorder %s25, 0
      %p169 = por %p167, %p168
      %p170 = scmp.ne.s32.totalorder %s162, %s164
      %p171 = scmp.eq.s32.totalorder %s30, 1
      %p172 = por %p170, %p171
      %p173 = scmp.ne.s32.totalorder %s164, %s165
      %p174 = scmp.eq.s32.totalorder %s30, 0
      %p175 = por %p173, %p174
      %p176 = scmp.ne.s32.totalorder %s164, %s165
      %p177 = scmp.eq.s32.totalorder %s31, 1
      %p178 = por %p176, %p177
      %p180 = scmp.ne.s32.totalorder %s165, %s179
      %p181 = scmp.eq.s32.totalorder %s31, 0
      %p182 = por %p180, %p181
      %s184 = sadd.s32 %s183, 1
      %p187 = scmp.eq.s32.totalorder %s25, 1
      %p188 = scmp.ne.s32.totalorder %s183, %s185
      %p189 = scmp.eq.s32.totalorder %s25, 0
      %p190 = por %p188, %p189
      %p191 = scmp.ne.s32.totalorder %s183, %s185
      %p192 = scmp.eq.s32.totalorder %s30, 1
      %p193 = por %p191, %p192
      %p194 = scmp.ne.s32.totalorder %s185, %s186
      %p195 = scmp.eq.s32.totalorder %s30, 0
      %p196 = por %p194, %p195
      %p197 = scmp.ne.s32.totalorder %s185, %s186
      %p198 = scmp.eq.s32.totalorder %s31, 1
      %p199 = por %p197, %p198
      %p201 = scmp.ne.s32.totalorder %s186, %s200
      %p202 = scmp.eq.s32.totalorder %s31, 0
      %p203 = por %p201, %p202
      %s205 = sadd.s32 %s204, 1
      %p208 = scmp.eq.s32.totalorder %s25, 1
      %p209 = scmp.ne.s32.totalorder %s204, %s206
      %p210 = scmp.eq.s32.totalorder %s25, 0
      %p211 = por %p209, %p210
      %p212 = scmp.ne.s32.totalorder %s204, %s206
      %p213 = scmp.eq.s32.totalorder %s30, 1
      %p214 = por %p212, %p213
      %p215 = scmp.ne.s32.totalorder %s206, %s207
      %p216 = scmp.eq.s32.totalorder %s30, 0
      %p217 = por %p215, %p216
      %p218 = scmp.ne.s32.totalorder %s206, %s207
      %p219 = scmp.eq.s32.totalorder %s31, 1
      %p220 = por %p218, %p219
      %p222 = scmp.ne.s32.totalorder %s207, %s221
      %p223 = scmp.eq.s32.totalorder %s31, 0
      %p224 = por %p222, %p223
      %s225 = ssub.s32 %s32, %s44
      %s226 = ssub.s32 %s33, %s40
      %s227 = sor.u32 %s225, %s226
      %p228 = scmp.eq.s32.totalorder %s227, 0
      %s230 = sadd.s32 %s229, 1
      %s231 = scalar_select %p228, %s229, %s230
      %p234 = pneg %p228
      %p235 = scmp.eq.s32.totalorder %s25, 1
      %p236 = por %p234, %p235
      %p237 = scmp.ne.s32.totalorder %s229, %s232
      %p238 = scmp.eq.s32.totalorder %s25, 0
      %p239 = por %p237, %p238
      %p240 = scmp.ne.s32.totalorder %s229, %s232
      %p241 = scmp.eq.s32.totalorder %s30, 1
      %p242 = por %p240, %p241
      %p243 = scmp.ne.s32.totalorder %s232, %s233
      %p244 = scmp.eq.s32.totalorder %s30, 0
      %p245 = por %p243, %p244
      %p246 = scmp.ne.s32.totalorder %s232, %s233
      %p247 = scmp.eq.s32.totalorder %s31, 1
      %p248 = por %p246, %p247
      %p250 = scmp.ne.s32.totalorder %s233, %s249
      %p251 = scmp.eq.s32.totalorder %s31, 0
      %p252 = por %p250, %p251
      %p253 = scmp.le.s32.totalorder 1, %s25
      %p254 = scmp.lt.s32.totalorder %s25, 3
      %p255 = pnand %p253, %p254
      %p256 = pneg %p255
      // Predicated region
      $region9: #{tpu_custom_call.1} parent=5 // pred_check
        _
      $region10: #{tpu_custom_call.1} parent=5 // pred_check_branch
        %258 = sbr.rel (%p255) target = $region12
      $region11: #{tpu_custom_call.1} parent=5 // pred_region
        %s259 = ssub.s32 %s25, 1
        // Predicated region
        $region13: #{tpu_custom_call.1} parent=11 // pred_check
          %p260 = pneg %p112
        $region14: #{tpu_custom_call.1} parent=11 // pred_check_branch
          %262 = sbr.rel (%p260) target = $region16
        $region15: #{tpu_custom_call.1} parent=11 // pred_region
          %s264 = ssub.s32 512, 512
          %265 = vsyncadd [#allocation8], %s264
          %s266 = sshll.u32 [#allocation9], 4
          %s267 = int_to_ptr.vmem [resolvable:$true] %s266
          %272 = dma.hbm_to_vmem [thread:$0]  %s2, 512, %s267, [#allocation8], 128, 128, 8
        $region16: #{tpu_custom_call.1} parent=11 // pred_fallthru
          _
        // Predicated region
        $region17: #{tpu_custom_call.1} parent=11 // pred_check
          %p273 = pneg %p133
        $region18: #{tpu_custom_call.1} parent=11 // pred_check_branch
          %275 = sbr.rel (%p273) target = $region20
        $region19: #{tpu_custom_call.1} parent=11 // pred_region
          %s277 = ssub.s32 512, 512
          %278 = vsyncadd [#allocation11], %s277
          %s279 = sshll.u32 [#allocation10], 4
          %s280 = int_to_ptr.vmem [resolvable:$true] %s279
          %285 = dma.hbm_to_vmem [thread:$0]  %s3, 512, %s280, [#allocation11], 128, 128, 8
        $region20: #{tpu_custom_call.1} parent=11 // pred_fallthru
          _
        // Predicated region
        $region21: #{tpu_custom_call.1} parent=11 // pred_check
          %p286 = pneg %p154
        $region22: #{tpu_custom_call.1} parent=11 // pred_check_branch
          %288 = sbr.rel (%p286) target = $region24
        $region23: #{tpu_custom_call.1} parent=11 // pred_region
          _
        $region24: #{tpu_custom_call.1} parent=11 // pred_fallthru
          _
        // Predicated region
        $region25: #{tpu_custom_call.1} parent=11 // pred_check
          %p289 = pneg %p175
        $region26: #{tpu_custom_call.1} parent=11 // pred_check_branch
          %291 = sbr.rel (%p289) target = $region28
        $region27: #{tpu_custom_call.1} parent=11 // pred_region
          _
        $region28: #{tpu_custom_call.1} parent=11 // pred_fallthru
          _
        // Predicated region
        $region29: #{tpu_custom_call.1} parent=11 // pred_check
          %p292 = pneg %p196
        $region30: #{tpu_custom_call.1} parent=11 // pred_check_branch
          %294 = sbr.rel (%p292) target = $region32
        $region31: #{tpu_custom_call.1} parent=11 // pred_region
          _
        $region32: #{tpu_custom_call.1} parent=11 // pred_fallthru
          _
        // Predicated region
        $region33: #{tpu_custom_call.1} parent=11 // pred_check
          %p295 = pneg %p217
        $region34: #{tpu_custom_call.1} parent=11 // pred_check_branch
          %297 = sbr.rel (%p295) target = $region36
        $region35: #{tpu_custom_call.1} parent=11 // pred_region
          _
        $region36: #{tpu_custom_call.1} parent=11 // pred_fallthru
          _
      $region12: #{tpu_custom_call.1} parent=5 // pred_fallthru
        _
      %p298 = scmp.lt.s32.totalorder %s25, 2
      // Predicated region
      $region37: #{tpu_custom_call.1} parent=5 // pred_check
        %p299 = pneg %p298
      $region38: #{tpu_custom_call.1} parent=5 // pred_check_branch
        %301 = sbr.rel (%p299) target = $region40
      $region39: #{tpu_custom_call.1} parent=5 // pred_region
        // Predicated region
        $region41: #{tpu_custom_call.1} parent=39 // pred_check
          %p302 = pneg %p59
        $region42: #{tpu_custom_call.1} parent=39 // pred_check_branch
          %304 = sbr.rel (%p302) target = $region44
        $region43: #{tpu_custom_call.1} parent=39 // pred_region
          %s305 = sand.u32 %s49, 1
          %s306 = scalar_lea.sflag [#allocation5], %s305
          %s307 = sand.u32 %s49, 1
          %s308 = smul.addr %s307, 8
          %s309 = scalar_lea.vmem [#allocation4], %s308
          %s311 = ssub.s32 128, 128
          %312 = vsyncadd %s306, %s311
          %s313 = sadd.s32 %s33, %s32
          %s314 = smul.addr %s313, 128
          %s315 = scalar_lea.hbm %s0, %s314
          %s317 = sshll.u32 %s309, 4
          %s318 = int_to_ptr.vmem [resolvable:$true] %s317
          %320 = dma.hbm_to_vmem [thread:$0]  %s315, 128, %s318, %s306
        $region44: #{tpu_custom_call.1} parent=39 // pred_fallthru
          _
        // Predicated region
        $region45: #{tpu_custom_call.1} parent=39 // pred_check
          %p321 = pneg %p85
        $region46: #{tpu_custom_call.1} parent=39 // pred_check_branch
          %323 = sbr.rel (%p321) target = $region48
        $region47: #{tpu_custom_call.1} parent=39 // pred_region
          %s324 = sand.u32 %s25, 1
          %s325 = scalar_lea.sflag [#allocation8], %s324
          %s326 = sand.u32 %s75, 1
          %s327 = smul.addr %s326, 8
          %s328 = scalar_lea.vmem [#allocation7], %s327
          %s330 = ssub.s32 128, 128
          %331 = vsyncadd %s325, %s330
          %s332 = smul.addr %s32, 128
          %s333 = scalar_lea.hbm %s1, %s332
          %s335 = sshll.u32 %s328, 4
          %s336 = int_to_ptr.vmem [resolvable:$true] %s335
          %338 = dma.hbm_to_vmem [thread:$0]  %s333, 128, %s336, %s325
        $region48: #{tpu_custom_call.1} parent=39 // pred_fallthru
          _
      $region40: #{tpu_custom_call.1} parent=5 // pred_fallthru
        _
      %p339 = scmp.le.s32.totalorder 1, %s25
      %p340 = scmp.lt.s32.totalorder %s25, 3
      %p341 = pnand %p339, %p340
      %p342 = pneg %p341
      // Predicated region
      $region49: #{tpu_custom_call.1} parent=5 // pred_check
        _
      $region50: #{tpu_custom_call.1} parent=5 // pred_check_branch
        %344 = sbr.rel (%p341) target = $region52
      $region51: #{tpu_custom_call.1} parent=5 // pred_region
        %s345 = ssub.s32 %s25, 1
        %s346 = sand.u32 %s52, 1
        %s347 = scalar_lea.sflag [#allocation5], %s346
        %s348 = sand.u32 %s52, 1
        %s349 = smul.addr %s348, 8
        %s350 = scalar_lea.vmem [#allocation4], %s349
        // Predicated region
        $region53: #{tpu_custom_call.1} parent=51 // pred_check
          %p351 = pneg %p65
        $region54: #{tpu_custom_call.1} parent=51 // pred_check_branch
          %353 = sbr.rel (%p351) target = $region56
        $region55: #{tpu_custom_call.1} parent=51 // pred_region
          %354 = dma.done %s347, 128
        $region56: #{tpu_custom_call.1} parent=51 // pred_fallthru
          _
        %s355 = sand.u32 %s30, 1
        %s356 = scalar_lea.sflag [#allocation8], %s355
        %s357 = sand.u32 %s78, 1
        %s358 = smul.addr %s357, 8
        %s359 = scalar_lea.vmem [#allocation7], %s358
        // Predicated region
        $region57: #{tpu_custom_call.1} parent=51 // pred_check
          %p360 = pneg %p91
        $region58: #{tpu_custom_call.1} parent=51 // pred_check_branch
          %362 = sbr.rel (%p360) target = $region60
        $region59: #{tpu_custom_call.1} parent=51 // pred_region
          %363 = dma.done %s356, 128
        $region60: #{tpu_custom_call.1} parent=51 // pred_fallthru
          _
        // Predicated region
        $region61: #{tpu_custom_call.1} parent=51 // pred_check
          %p364 = pneg %p112
        $region62: #{tpu_custom_call.1} parent=51 // pred_check_branch
          %366 = sbr.rel (%p364) target = $region64
        $region63: #{tpu_custom_call.1} parent=51 // pred_region
          %367 = dma.done [#allocation8], 512
        $region64: #{tpu_custom_call.1} parent=51 // pred_fallthru
          _
        // Predicated region
        $region65: #{tpu_custom_call.1} parent=51 // pred_check
          %p368 = pneg %p133
        $region66: #{tpu_custom_call.1} parent=51 // pred_check_branch
          %370 = sbr.rel (%p368) target = $region68
        $region67: #{tpu_custom_call.1} parent=51 // pred_region
          %371 = dma.done [#allocation11], 512
        $region68: #{tpu_custom_call.1} parent=51 // pred_fallthru
          _
        %s372 = sand.u32 %s52, 1
        %s373 = scalar_lea.sflag [#allocation5], %s372
        %s374 = sand.u32 %s52, 1
        %s375 = smul.addr %s374, 8
        %s376 = scalar_lea.vmem [#allocation4], %s375
        %p377 = pneg %p65
        %p378 = pneg %p62
        %s379 = sand.u32 %s30, 1
        %s380 = scalar_lea.sflag [#allocation8], %s379
        %s381 = sand.u32 %s78, 1
        %s382 = smul.addr %s381, 8
        %s383 = scalar_lea.vmem [#allocation7], %s382
        %p384 = pneg %p91
        %p385 = pneg %p88
        %p386 = pneg %p112
        %p387 = pneg %p109
        %p388 = pneg %p133
        %p389 = pneg %p130
        %p390 = pneg %p154
        %p391 = pneg %p151
        %p392 = pneg %p175
        %p393 = pneg %p172
        %p394 = pneg %p196
        %p395 = pneg %p193
        %p396 = pneg %p217
        %p397 = pneg %p214
        %p398 = pneg %p245
        %p399 = pneg %p242
        %s400 = sand.u32 %s232, 1
        %s401 = scalar_lea.sflag [#allocation6], %s400
        %s402 = sand.u32 %s232, 1
        %s403 = smul.addr %s402, 8
        %s404 = scalar_lea.vmem [#allocation12], %s403
        %p405 = scmp.eq.s32.totalorder %s35, 0
        // Predicated region
        $region69: #{tpu_custom_call.1} parent=51 // pred_check
          %p406 = pneg %p405
        $region70: #{tpu_custom_call.1} parent=51 // pred_check_branch
          %408 = sbr.rel (%p406) target = $region72
        $region71: #{tpu_custom_call.1} parent=51 // pred_region
          %v409 = vld [vmem:[%s359] sm:$0xff]
          %v410 = vld [vmem:[#allocation10] sm:$0xff]
          %v411 = vld [vmem:[#allocation10 + $0x8] sm:$0xff]
          %v412 = vld [vmem:[#allocation10 + $0x10] sm:$0xff]
          %v413 = vld [vmem:[#allocation10 + $0x18] sm:$0xff]
          %v414 = vld [vmem:[%s5] sm:$0x1]
          %v416 = vlaneseq
          %v417 = vshrl.u32 %v416, 7
          %v418 = vsub.s32 0, %v417
          %v419 = vrot.slane %v414, %v418
          %vm421 = vcmask 261120
          %v423 = vsel %vm421, %v409, 0
          %425 = vmatprep.subr.mxu0 0.0
          %426 = vmatpush1.msra.mxu0 0.0
          %427 = vmatprep.subr.mxu0 0.0
          %428 = vmatpush1.msra.mxu0 0.0
          %429 = vmatprep.subr.mxu0 0.0
          %430 = vmatpush1.msra.mxu0 0.0
          %431 = vmatprep.subr.mxu0 0.0
          %432 = vmatpush1.msra.mxu0 0.0
          %433 = vmatprep.subr.mxu0 0.0
          %434 = vmatpush1.msra.mxu0 0.0
          %435 = vmatprep.subr.mxu0 0.0
          %436 = vmatpush1.msra.mxu0 0.0
          %437 = vmatprep.subr.mxu0 0.0
          %438 = vmatpush1.msra.mxu0 0.0
          %439 = vmatprep.subr.mxu0 0.0
          %440 = vmatpush1.msra.mxu0 0.0
          %441 = vmatprep.subr.mxu0 0.0
          %442 = vmatpush1.msra.mxu0 0.0
          %443 = vmatprep.subr.mxu0 0.0
          %444 = vmatpush1.msra.mxu0 0.0
          %445 = vmatprep.subr.mxu0 0.0
          %446 = vmatpush1.msra.mxu0 0.0
          %447 = vmatprep.subr.mxu0 0.0
          %448 = vmatpush1.msra.mxu0 0.0
          %449 = vmatprep.subr.mxu0 0.0
          %450 = vmatpush1.msra.mxu0 %v413
          %451 = vmatprep.subr.mxu0 0.0
          %452 = vmatpush1.msra.mxu0 %v412
          %453 = vmatprep.subr.mxu0 0.0
          %454 = vmatpush1.msra.mxu0 %v411
          %455 = vmatprep.subr.mxu0 0.0
          %456 = vmatpush1.msra.mxu0 %v410
          %457 = vmatprep.subr.mxu0 0.0
          %458 = vmatpush2.msra.mxu0 0.0
          %459 = vmatprep.subr.mxu0 0.0
          %460 = vmatpush2.msra.mxu0 0.0
          %461 = vmatprep.subr.mxu0 0.0
          %462 = vmatpush2.msra.mxu0 0.0
          %463 = vmatprep.subr.mxu0 0.0
          %464 = vmatpush2.msra.mxu0 0.0
          %465 = vmatprep.subr.mxu0 0.0
          %466 = vmatpush2.msra.mxu0 0.0
          %467 = vmatprep.subr.mxu0 0.0
          %468 = vmatpush2.msra.mxu0 0.0
          %469 = vmatprep.subr.mxu0 0.0
          %470 = vmatpush2.msra.mxu0 0.0
          %471 = vmatprep.subr.mxu0 0.0
          %472 = vmatpush2.msra.mxu0 0.0
          %473 = vmatprep.subr.mxu0 0.0
          %474 = vmatpush2.msra.mxu0 0.0
          %475 = vmatprep.subr.mxu0 0.0
          %476 = vmatpush2.msra.mxu0 0.0
          %477 = vmatprep.subr.mxu0 0.0
          %478 = vmatpush2.msra.mxu0 0.0
          %479 = vmatprep.subr.mxu0 0.0
          %480 = vmatpush2.msra.mxu0 0.0
          %481 = vmatprep.subr.mxu0 0.0
          %482 = vmatpush2.msra.mxu0 0.0
          %483 = vmatprep.subr.mxu0 0.0
          %484 = vmatpush2.msra.mxu0 0.0
          %485 = vmatprep.subr.mxu0 0.0
          %486 = vmatpush2.msra.mxu0 0.0
          %487 = vmatprep.subr.mxu0 0.0
          %488 = vmatpush2.msra.mxu0 0.0
          %489 = vmatprep.mubr.f32.mxu0 0.0
          %490 = vmatmul.mubr.f32.gmra.mxu0 %v423
          %v491 = vpop.f32.mrf.mxu0
          %v492 = vadd.f32 %v419, %v491
          %v493 = vpop.f32.mrf.mxu0
          %494 = vdwg.mxu0
          %495 = vst.msk [vmem:[#allocation2] sm:$0xff] %vm421, %v492
        $region72: #{tpu_custom_call.1} parent=51 // pred_fallthru
          _
        %v496 = vld [vmem:[%s350] sm:$0xff]
        %v497 = vld [vmem:[#allocation9] sm:$0xff]
        %v498 = vld [vmem:[#allocation9 + $0x8] sm:$0xff]
        %v499 = vld [vmem:[#allocation9 + $0x10] sm:$0xff]
        %v500 = vld [vmem:[#allocation9 + $0x18] sm:$0xff]
        %v501 = vld [vmem:[%s4] sm:$0x1]
        %v503 = vlaneseq
        %v504 = vshrl.u32 %v503, 7
        %v505 = vsub.s32 0, %v504
        %v506 = vrot.slane %v501, %v505
        %vm508 = vcmask 261120
        %v510 = vsel %vm508, %v496, 0
        %512 = vmatprep.subr.mxu0 0.0
        %513 = vmatpush1.msra.mxu0 0.0
        %514 = vmatprep.subr.mxu0 0.0
        %515 = vmatpush1.msra.mxu0 0.0
        %516 = vmatprep.subr.mxu0 0.0
        %517 = vmatpush1.msra.mxu0 0.0
        %518 = vmatprep.subr.mxu0 0.0
        %519 = vmatpush1.msra.mxu0 0.0
        %520 = vmatprep.subr.mxu0 0.0
        %521 = vmatpush1.msra.mxu0 0.0
        %522 = vmatprep.subr.mxu0 0.0
        %523 = vmatpush1.msra.mxu0 0.0
        %524 = vmatprep.subr.mxu0 0.0
        %525 = vmatpush1.msra.mxu0 0.0
        %526 = vmatprep.subr.mxu0 0.0
        %527 = vmatpush1.msra.mxu0 0.0
        %528 = vmatprep.subr.mxu0 0.0
        %529 = vmatpush1.msra.mxu0 0.0
        %530 = vmatprep.subr.mxu0 0.0
        %531 = vmatpush1.msra.mxu0 0.0
        %532 = vmatprep.subr.mxu0 0.0
        %533 = vmatpush1.msra.mxu0 0.0
        %534 = vmatprep.subr.mxu0 0.0
        %535 = vmatpush1.msra.mxu0 0.0
        %536 = vmatprep.subr.mxu0 0.0
        %537 = vmatpush1.msra.mxu0 %v500
        %538 = vmatprep.subr.mxu0 0.0
        %539 = vmatpush1.msra.mxu0 %v499
        %540 = vmatprep.subr.mxu0 0.0
        %541 = vmatpush1.msra.mxu0 %v498
        %542 = vmatprep.subr.mxu0 0.0
        %543 = vmatpush1.msra.mxu0 %v497
        %544 = vmatprep.subr.mxu0 0.0
        %545 = vmatpush2.msra.mxu0 0.0
        %546 = vmatprep.subr.mxu0 0.0
        %547 = vmatpush2.msra.mxu0 0.0
        %548 = vmatprep.subr.mxu0 0.0
        %549 = vmatpush2.msra.mxu0 0.0
        %550 = vmatprep.subr.mxu0 0.0
        %551 = vmatpush2.msra.mxu0 0.0
        %552 = vmatprep.subr.mxu0 0.0
        %553 = vmatpush2.msra.mxu0 0.0
        %554 = vmatprep.subr.mxu0 0.0
        %555 = vmatpush2.msra.mxu0 0.0
        %556 = vmatprep.subr.mxu0 0.0
        %557 = vmatpush2.msra.mxu0 0.0
        %558 = vmatprep.subr.mxu0 0.0
        %559 = vmatpush2.msra.mxu0 0.0
        %560 = vmatprep.subr.mxu0 0.0
        %561 = vmatpush2.msra.mxu0 0.0
        %562 = vmatprep.subr.mxu0 0.0
        %563 = vmatpush2.msra.mxu0 0.0
        %564 = vmatprep.subr.mxu0 0.0
        %565 = vmatpush2.msra.mxu0 0.0
        %566 = vmatprep.subr.mxu0 0.0
        %567 = vmatpush2.msra.mxu0 0.0
        %568 = vmatprep.subr.mxu0 0.0
        %569 = vmatpush2.msra.mxu0 0.0
        %570 = vmatprep.subr.mxu0 0.0
        %571 = vmatpush2.msra.mxu0 0.0
        %572 = vmatprep.subr.mxu0 0.0
        %573 = vmatpush2.msra.mxu0 0.0
        %574 = vmatprep.subr.mxu0 0.0
        %575 = vmatpush2.msra.mxu0 0.0
        %576 = vmatprep.mubr.f32.mxu0 0.0
        %577 = vmatmul.mubr.f32.gmra.mxu0 %v510
        %v578 = vpop.f32.mrf.mxu0
        %v579 = vadd.f32 %v506, %v578
        %v580 = vpop.f32.mrf.mxu0
        %581 = vdwg.mxu0
        %v583 = vcombine.high %v579, %v579
        %v585 = vunpack.c.l.s4 1966171168
        %v586 = vunpack.c.0.s8 %v585
        %v587 = vlaneseq
        %v588 = vshrl.u32 %v587, 7
        %v589 = vsub.s32 %v586, %v588
        %v590 = vrot.slane %v579, %v589
        %v592 = vunpack.c.l.s4 1966171168
        %v593 = vunpack.c.0.s8 %v592
        %v594 = vlaneseq
        %v595 = vshrl.u32 %v594, 7
        %v596 = vsub.s32 %v593, %v595
        %v597 = vrot.slane %v583, %v596
        %v598 = vcombine.high %v590, %v590
        %v599 = vcombine.high %v597, %v597
        %v601 = vunpack.c.l.s4 1966171168
        %v602 = vunpack.c.0.s8 %v601
        %v603 = vlaneseq
        %v604 = vshrl.u32 %v603, 7
        %v605 = vsub.s32 %v602, %v604
        %v606 = vrot.slane %v590, %v605
        %v608 = vunpack.c.l.s4 1966171168
        %v609 = vunpack.c.0.s8 %v608
        %v610 = vlaneseq
        %v611 = vshrl.u32 %v610, 7
        %v612 = vsub.s32 %v609, %v611
        %v613 = vrot.slane %v597, %v612
        %v615 = vunpack.c.l.s4 1966171168
        %v616 = vunpack.c.0.s8 %v615
        %v617 = vlaneseq
        %v618 = vshrl.u32 %v617, 7
        %v619 = vsub.s32 %v616, %v618
        %v620 = vrot.slane %v598, %v619
        %v622 = vunpack.c.l.s4 1966171168
        %v623 = vunpack.c.0.s8 %v622
        %v624 = vlaneseq
        %v625 = vshrl.u32 %v624, 7
        %v626 = vsub.s32 %v623, %v625
        %v627 = vrot.slane %v599, %v626
        %v628 = vcombine.high %v606, %v606
        %v629 = vcombine.high %v613, %v613
        %v630 = vcombine.high %v620, %v620
        %v631 = vcombine.high %v627, %v627
        %v632 = vld [vmem:[#allocation2] sm:$0xff]
        %v633 = vlaneseq
        %v634 = vshrl.u32 %v633, 7
        %v635 = vsub.s32 0, %v634
        %v636 = vrot.slane %v606, %v635
        %v637 = vlaneseq
        %v638 = vshrl.u32 %v637, 7
        %v639 = vsub.s32 0, %v638
        %v640 = vrot.slane %v620, %v639
        %v641 = vlaneseq
        %v642 = vshrl.u32 %v641, 7
        %v643 = vsub.s32 0, %v642
        %v644 = vrot.slane %v628, %v643
        %v645 = vlaneseq
        %v646 = vshrl.u32 %v645, 7
        %v647 = vsub.s32 0, %v646
        %v648 = vrot.slane %v630, %v647
        %v649 = vlaneseq
        %v650 = vshrl.u32 %v649, 7
        %v651 = vsub.s32 0, %v650
        %v652 = vrot.slane %v613, %v651
        %v653 = vlaneseq
        %v654 = vshrl.u32 %v653, 7
        %v655 = vsub.s32 0, %v654
        %v656 = vrot.slane %v627, %v655
        %v657 = vlaneseq
        %v658 = vshrl.u32 %v657, 7
        %v659 = vsub.s32 0, %v658
        %v660 = vrot.slane %v629, %v659
        %v661 = vlaneseq
        %v662 = vshrl.u32 %v661, 7
        %v663 = vsub.s32 0, %v662
        %v664 = vrot.slane %v631, %v663
        %v673 = vadd.f32 %v636, %v632
        %v674 = vadd.f32 %v640, %v632
        %v675 = vadd.f32 %v644, %v632
        %v676 = vadd.f32 %v648, %v632
        %v677 = vadd.f32 %v652, %v632
        %v678 = vadd.f32 %v656, %v632
        %v679 = vadd.f32 %v660, %v632
        %v680 = vadd.f32 %v664, %v632
        %v681 = vtanh.pop %v673
        %v682 = vtanh.pop %v674
        %v683 = vtanh.pop %v675
        %v684 = vtanh.pop %v676
        %v685 = vtanh.pop %v677
        %v686 = vtanh.pop %v678
        %v687 = vtanh.pop %v679
        %v688 = vtanh.pop %v680
        %v689 = vld [vmem:[%s6] sm:$0x1]
        %v691 = vlaneseq
        %v692 = vshrl.u32 %v691, 7
        %v693 = vsub.s32 0, %v692
        %v694 = vrot.slane %v689, %v693
        %v696 = vmul.f32 %v681, %v694
        %v697 = vmul.f32 %v682, %v694
        %v698 = vmul.f32 %v683, %v694
        %v699 = vmul.f32 %v684, %v694
        %v700 = vmul.f32 %v685, %v694
        %v701 = vmul.f32 %v686, %v694
        %v702 = vmul.f32 %v687, %v694
        %v703 = vmul.f32 %v688, %v694
        %v704 = vsel %vm508, %v696, 0.0
        %705 = vadd.xlane.f32.xlu0 %v704
        %v706 = vpop.xlane.xlu0 %705
        %v707 = vsel %vm508, %v697, 0.0
        %708 = vadd.xlane.f32.xlu0 %v707
        %v709 = vpop.xlane.xlu0 %708
        %v710 = vsel %vm508, %v698, 0.0
        %711 = vadd.xlane.f32.xlu0 %v710
        %v712 = vpop.xlane.xlu0 %711
        %v713 = vsel %vm508, %v699, 0.0
        %714 = vadd.xlane.f32.xlu0 %v713
        %v715 = vpop.xlane.xlu0 %714
        %v716 = vsel %vm508, %v700, 0.0
        %717 = vadd.xlane.f32.xlu0 %v716
        %v718 = vpop.xlane.xlu0 %717
        %v719 = vsel %vm508, %v701, 0.0
        %720 = vadd.xlane.f32.xlu0 %v719
        %v721 = vpop.xlane.xlu0 %720
        %v722 = vsel %vm508, %v702, 0.0
        %723 = vadd.xlane.f32.xlu0 %v722
        %v724 = vpop.xlane.xlu0 %723
        %v725 = vsel %vm508, %v703, 0.0
        %726 = vadd.xlane.f32.xlu0 %v725
        %v727 = vpop.xlane.xlu0 %726
        %s728 = sld [smem:[#allocation3]]
        %v729 = vstv %s728
        %v730 = vadd.f32 %v706, %v729
        %v731 = vadd.f32 %v709, %v729
        %v732 = vadd.f32 %v712, %v729
        %v733 = vadd.f32 %v715, %v729
        %v734 = vadd.f32 %v718, %v729
        %v735 = vadd.f32 %v721, %v729
        %v736 = vadd.f32 %v724, %v729
        %v737 = vadd.f32 %v727, %v729
        %v746 = vlaneseq
        %v747 = vand.u32 %v746, 127
        %v748 = vlaneseq
        %v749 = vshrl.u32 %v748, 7
        %v750 = vsub.s32 %v747, %v749
        %v751 = vrot.slane %v730, %v750
        %v752 = vlaneseq
        %v753 = vshrl.u32 %v752, 7
        %v754 = vsub.s32 %v747, %v753
        %v755 = vrot.slane %v731, %v754
        %v756 = vlaneseq
        %v757 = vshrl.u32 %v756, 7
        %v758 = vsub.s32 %v747, %v757
        %v759 = vrot.slane %v732, %v758
        %v760 = vlaneseq
        %v761 = vshrl.u32 %v760, 7
        %v762 = vsub.s32 %v747, %v761
        %v763 = vrot.slane %v733, %v762
        %v764 = vlaneseq
        %v765 = vshrl.u32 %v764, 7
        %v766 = vsub.s32 %v747, %v765
        %v767 = vrot.slane %v734, %v766
        %v768 = vlaneseq
        %v769 = vshrl.u32 %v768, 7
        %v770 = vsub.s32 %v747, %v769
        %v771 = vrot.slane %v735, %v770
        %v772 = vlaneseq
        %v773 = vshrl.u32 %v772, 7
        %v774 = vsub.s32 %v747, %v773
        %v775 = vrot.slane %v736, %v774
        %v776 = vlaneseq
        %v777 = vshrl.u32 %v776, 7
        %v778 = vsub.s32 %v747, %v777
        %v779 = vrot.slane %v737, %v778
        %vm780 = vcmask 1041409
        %v781 = vsel %vm780, %v755, %v751
        %vm782 = vcmask 1042434
        %v783 = vsel %vm782, %v759, %v781
        %vm784 = vcmask 1043459
        %v785 = vsel %vm784, %v763, %v783
        %vm786 = vcmask 1044484
        %v787 = vsel %vm786, %v767, %v785
        %vm788 = vcmask 1045509
        %v789 = vsel %vm788, %v771, %v787
        %vm790 = vcmask 1046534
        %v791 = vsel %vm790, %v775, %v789
        %vm792 = vcmask 1047559
        %v793 = vsel %vm792, %v779, %v791
        %vm795 = vcmask 64512
        %796 = vst.msk [vmem:[%s404] sm:$0xff] %vm795, %v793
        %s797 = sand.u32 %s232, 1
        %s798 = scalar_lea.sflag [#allocation6], %s797
        %s799 = sand.u32 %s232, 1
        %s800 = smul.addr %s799, 8
        %s801 = scalar_lea.vmem [#allocation12], %s800
        // Predicated region
        $region73: #{tpu_custom_call.1} parent=51 // pred_check
          %p802 = pneg %p242
        $region74: #{tpu_custom_call.1} parent=51 // pred_check_branch
          %804 = sbr.rel (%p802) target = $region76
        $region75: #{tpu_custom_call.1} parent=51 // pred_region
          %s806 = ssub.s32 128, 128
          %807 = vsyncadd %s798, %s806
          %s808 = sadd.s32 %s35, %s34
          %s809 = smul.addr %s808, 128
          %s810 = scalar_lea.hbm %s8, %s809
          %s812 = sshll.u32 %s801, 4
          %s813 = int_to_ptr.vmem [resolvable:$true] %s812
          %815 = dma.vmem_to_hbm [thread:$0]  %s813, 128, %s810, %s798
        $region76: #{tpu_custom_call.1} parent=51 // pred_fallthru
          _
      $region52: #{tpu_custom_call.1} parent=5 // pred_fallthru
        _
      %p816 = scmp.le.s32.totalorder 2, %s25
      // Predicated region
      $region77: #{tpu_custom_call.1} parent=5 // pred_check
        %p817 = pneg %p816
      $region78: #{tpu_custom_call.1} parent=5 // pred_check_branch
        %819 = sbr.rel (%p817) target = $region80
      $region79: #{tpu_custom_call.1} parent=5 // pred_region
        %s820 = ssub.s32 %s25, 2
        // Predicated region
        $region81: #{tpu_custom_call.1} parent=79 // pred_check
          %p821 = pneg %p248
        $region82: #{tpu_custom_call.1} parent=79 // pred_check_branch
          %823 = sbr.rel (%p821) target = $region84
        $region83: #{tpu_custom_call.1} parent=79 // pred_region
          %s824 = sand.u32 %s233, 1
          %s825 = scalar_lea.sflag [#allocation6], %s824
          %s826 = sand.u32 %s233, 1
          %s827 = smul.addr %s826, 8
          %s828 = scalar_lea.vmem [#allocation12], %s827
          %829 = dma.done %s825, 128
        $region84: #{tpu_custom_call.1} parent=79 // pred_fallthru
          _
      $region80: #{tpu_custom_call.1} parent=5 // pred_fallthru
        _
    $region6: #{tpu_custom_call.1} parent=1 // loop_footer
      %s29 = sadd.s32 1, %s25
    $region7: #{tpu_custom_call.1} parent=1 // loop_footer_branch
      %24 = sbr.rel target = $region3
    $region8: #{tpu_custom_call.1} parent=1 // loop_exit
      _
    %830 = vsyncpa [#allocation5], 1
    %s831 = scalar_lea.sflag [#allocation5], 1
    %832 = vsyncpa %s831, 1
    %833 = vsyncpa [#allocation8], 1
    %s834 = scalar_lea.sflag [#allocation8], 1
    %835 = vsyncpa %s834, 1
    %836 = vsyncpa [#allocation11], 1
    %837 = vsyncpa [#allocation6], 1
    %s838 = scalar_lea.sflag [#allocation6], 1
    %839 = vsyncpa %s838, 1

</llo_original>
